<compile_context>
chip_gen: v7x
topology: tpu7x:2x2x1
jax: 0.10.0
libtpu: 0.0.40
codegen_flags: <defaults>
</compile_context>

<pallas_src>
import functools

import jax
import jax.numpy as jnp
from jax.experimental import pallas as pl
from jax.experimental.pallas import tpu as pltpu


# ----------------------------------------------------------------------------
# Kernel
# ----------------------------------------------------------------------------
def _mlp_kernel(x_ref, wg_ref, wu_ref, wd_ref, o_ref, acc_ref):
    """One (token-tile, I-tile) grid step of the SwiGLU MLP."""
    j = pl.program_id(1)

    @pl.when(j == 0)
    def _init():
        acc_ref[...] = jnp.zeros_like(acc_ref)

    x = x_ref[...]                                                    # (tm, H)
    g = jnp.dot(x, wg_ref[...], preferred_element_type=jnp.float32)  # (tm, ti)
    u = jnp.dot(x, wu_ref[...], preferred_element_type=jnp.float32)  # (tm, ti)
    g = g * jax.nn.sigmoid(g)                # SiLU, reuse g (fewer live f32 bufs)
    h = (g * u).astype(x.dtype)              # back to bf16/f32 for the MXU
    acc_ref[...] += jnp.dot(h, wd_ref[...], preferred_element_type=jnp.float32)

    @pl.when(j == pl.num_programs(1) - 1)
    def _finalize():
        o_ref[...] = acc_ref[...].astype(o_ref.dtype)


# ----------------------------------------------------------------------------
# Tile selection / helpers
# ----------------------------------------------------------------------------
def _round_up(x, m):
    return (x + m - 1) // m * m


def _vmem_limit_bytes():
    """~7/8 of this generation's VMEM (64 MiB on v7x, 128 MiB on v5e/v6e)."""
    try:
        return int(pltpu.get_tpu_info().vmem_capacity_bytes) * 7 // 8
    except Exception:
        return None  # fall back to the compiler's default scoped limit


def _select_tiles(M, H, I, dtype, vmem_limit):
    itemsize = jnp.dtype(dtype).itemsize
    pack = max(8, 32 // itemsize)             # sublane packing: 8 f32 / 16 bf16
    tm = min(256, _round_up(M, pack))         # full tile for real M, small otherwise

    budget = int((vmem_limit if vmem_limit is not None else 32 * 1024 * 1024) * 0.7)
    cands = sorted(
        {I} | {c for c in (2048, 1024, 512, 256, 128) if c < I and I % c == 0},
        reverse=True,
    )
    for ti in cands:
        # 3 weight tiles (gate+up+down) double-buffered, x/out tiles double-
        # buffered, plus the f32 accumulator.
        need = (2 * 3 * H * ti * itemsize
                + 2 * 2 * tm * H * itemsize
                + tm * H * 4)
        if need <= budget:
            return tm, ti
    return tm, cands[-1]


def prepare_weights(w_gate, w_up, w_down, dtype=None):
    """One-time conversion from PyTorch (out,in) layout to kernel layout.

    Call this once at model-load time; do NOT put it on the per-call path.
    Returns (wg_t (H,I), wu_t (H,I), wd_t (I,H)), optionally cast to `dtype`
    (e.g. jnp.bfloat16).
    """
    wg_t, wu_t, wd_t = w_gate.T, w_up.T, w_down.T
    if dtype is not None:
        wg_t, wu_t, wd_t = (w.astype(dtype) for w in (wg_t, wu_t, wd_t))
    return wg_t, wu_t, wd_t


# ----------------------------------------------------------------------------
# pallas_call wrapper
# ----------------------------------------------------------------------------
@functools.partial(jax.jit, static_argnames=("tm", "ti", "vmem_limit"))
def _mlp_call(x2, wg_t, wu_t, wd_t, *, tm, ti, vmem_limit):
    M, H = x2.shape
    I = wg_t.shape[1]

    M_pad = _round_up(M, tm)
    if M_pad != M:
        x2 = jnp.pad(x2, ((0, M_pad - M), (0, 0)))

    cp_kwargs = dict(dimension_semantics=("parallel", "arbitrary"))
    if vmem_limit is not None:
        cp_kwargs["vmem_limit_bytes"] = int(vmem_limit)

    out = pl.pallas_call(
        _mlp_kernel,
        out_shape=jax.ShapeDtypeStruct((M_pad, H), x2.dtype),
        grid_spec=pltpu.PrefetchScalarGridSpec(
            num_scalar_prefetch=0,
            grid=(M_pad // tm, I // ti),
            in_specs=[
                pl.BlockSpec((tm, H), lambda i, j: (i, 0)),   # x tile
                pl.BlockSpec((H, ti), lambda i, j: (0, j)),   # gate weight cols
                pl.BlockSpec((H, ti), lambda i, j: (0, j)),   # up weight cols
                pl.BlockSpec((ti, H), lambda i, j: (j, 0)),   # down weight rows
            ],
            out_specs=pl.BlockSpec((tm, H), lambda i, j: (i, 0)),
            scratch_shapes=[pltpu.VMEM((tm, H), jnp.float32)],
        ),
        compiler_params=pltpu.CompilerParams(**cp_kwargs),
    )(x2, wg_t, wu_t, wd_t)

    return out[:M]


def llama_mlp(x, wg_t, wu_t, wd_t, *, tm=None, ti=None):
    """x: [B, S, H]; weights already in kernel layout (see prepare_weights)."""
    B, S, H = x.shape
    assert wg_t.shape[0] == H and wu_t.shape[0] == H and wd_t.shape[1] == H
    I = wg_t.shape[1]
    M = B * S

    vmem_limit = _vmem_limit_bytes()
    tm_sel, ti_sel = _select_tiles(M, H, I, x.dtype, vmem_limit)
    if tm is not None:
        tm_sel = int(tm)
    if ti is not None:
        ti_sel = int(ti)
    assert I % ti_sel == 0, f"intermediate_size {I} not divisible by ti={ti_sel}"

    out = _mlp_call(x.reshape(M, H), wg_t, wu_t, wd_t,
                    tm=int(tm_sel), ti=int(ti_sel), vmem_limit=vmem_limit)
    return out.reshape(B, S, H)


# ----------------------------------------------------------------------------
# Reference (matches the PyTorch module, PyTorch weight layout)
# ----------------------------------------------------------------------------
def _reference(x, w_gate, w_up, w_down):
    g = x @ w_gate.T
    u = x @ w_up.T
    return (jax.nn.silu(g) * u) @ w_down.T


if __name__ == "__main__":
    # Small LlamaMLP config (hidden_act="silu")
    batch, seq = 2, 8
    hidden_size = 256
    intermediate_size = 512

    key = jax.random.PRNGKey(0)
    kx, kg, ku, kd = jax.random.split(key, 4)

    x = jax.random.normal(kx, (batch, seq, hidden_size), dtype=jnp.float32)
    # PyTorch nn.Linear (out_features, in_features) layout.
    w_gate = jax.random.normal(kg, (intermediate_size, hidden_size), jnp.float32) * 0.02
    w_up = jax.random.normal(ku, (intermediate_size, hidden_size), jnp.float32) * 0.02
    w_down = jax.random.normal(kd, (hidden_size, intermediate_size), jnp.float32) * 0.02

    # One-time weight layout conversion (load time, outside the jitted path).
    wg_t, wu_t, wd_t = prepare_weights(w_gate, w_up, w_down)

    # --- check 1: f32, uneven M (exercises padding) + forced multi-step I
    #              reduction (exercises the accumulator init/finalize path) ---
    x_odd = x[:, :7]                                  # M = 14, not tile-aligned
    y = llama_mlp(x_odd, wg_t, wu_t, wd_t, ti=256)
    jax.block_until_ready(y)
    y_ref = _reference(x_odd, w_gate, w_up, w_down)
    assert jnp.allclose(y, y_ref, atol=1e-4, rtol=1e-4), "f32 mismatch vs reference"

    # --- check 2: bf16 weights/activations with f32 accumulation (auto tiles) ---
    wg_b, wu_b, wd_b = prepare_weights(w_gate, w_up, w_down, dtype=jnp.bfloat16)
    x_b = x.astype(jnp.bfloat16)
    y_b = llama_mlp(x_b, wg_b, wu_b, wd_b)
    jax.block_until_ready(y_b)
    y_ref_b = _reference(
        x_b.astype(jnp.float32),
        wg_b.T.astype(jnp.float32),
        wu_b.T.astype(jnp.float32),
        wd_b.T.astype(jnp.float32),
    )
    assert jnp.allclose(y_b.astype(jnp.float32), y_ref_b, atol=2e-2, rtol=2e-2), \
        "bf16 mismatch vs reference"

    print("KERNEL_OK")
</pallas_src>

<mosaic_0001>
module attributes {stable_mosaic.version = 11 : i64} {
  func.func @_mlp_kernel(%arg0: i32, %arg1: i32, %arg2: memref<16x256xf32, #tpu.memory_space<vmem>>, %arg3: memref<256x256xf32, #tpu.memory_space<vmem>>, %arg4: memref<256x256xf32, #tpu.memory_space<vmem>>, %arg5: memref<256x256xf32, #tpu.memory_space<vmem>>, %arg6: memref<16x256xf32, #tpu.memory_space<vmem>>, %arg7: memref<16x256xf32, #tpu.memory_space<vmem>>) attributes {dimension_semantics = [#tpu.dimension_semantics<parallel>, #tpu.dimension_semantics<arbitrary>], iteration_bounds = array<i64: 1, 2>, scalar_prefetch = 0 : i64, scratch_operands = 1 : i64, tpu.core_type = #tpu.core_type<tc>, window_params = [{transform_indices = @transform_0, window_bounds = array<i64: 16, 256>}, {transform_indices = @transform_1, window_bounds = array<i64: 256, 256>}, {transform_indices = @transform_2, window_bounds = array<i64: 256, 256>}, {transform_indices = @transform_3, window_bounds = array<i64: 256, 256>}, {transform_indices = @transform_4, window_bounds = array<i64: 16, 256>}]} {
    %c0_i32 = arith.constant 0 : i32
    %0 = arith.cmpi eq, %arg1, %c0_i32 : i32
    %1 = arith.extui %0 : i1 to i32
    %c0_i32_0 = arith.constant 0 : i32
    %2 = arith.cmpi ne, %1, %c0_i32_0 : i32
    scf.if %2 {
      %cst_16 = arith.constant 0.000000e+00 : f32
      %23 = vector.broadcast %cst_16 : f32 to vector<16x256xf32>
      %c0_17 = arith.constant 0 : index
      %c0_18 = arith.constant 0 : index
      %24 = vector.load %arg7[%c0_17, %c0_18] : memref<16x256xf32, #tpu.memory_space<vmem>>, vector<16x256xf32>
      tpu.vector_store %arg7[%c0_17, %c0_18], %23 {strides = array<i32>} : memref<16x256xf32, #tpu.memory_space<vmem>>, vector<16x256xf32>,
    } else {
    }
    %c0 = arith.constant 0 : index
    %c0_1 = arith.constant 0 : index
    %3 = vector.load %arg2[%c0, %c0_1] : memref<16x256xf32, #tpu.memory_space<vmem>>, vector<16x256xf32>
    %c0_2 = arith.constant 0 : index
    %c0_3 = arith.constant 0 : index
    %4 = vector.load %arg3[%c0_2, %c0_3] : memref<256x256xf32, #tpu.memory_space<vmem>>, vector<256x256xf32>
    %cst = arith.constant dense<0.000000e+00> : vector<16x256xf32>
    %5 = tpu.matmul %3, %4, %cst {dimension_numbers = #tpu.dot_dimension_numbers<[1], [0], [0], [1], [0, 0, 1, 1], [], []>} : vector<16x256xf32>, vector<256x256xf32>, vector<16x256xf32> -> vector<16x256xf32>
    %c0_4 = arith.constant 0 : index
    %c0_5 = arith.constant 0 : index
    %6 = vector.load %arg4[%c0_4, %c0_5] : memref<256x256xf32, #tpu.memory_space<vmem>>, vector<256x256xf32>
    %cst_6 = arith.constant dense<0.000000e+00> : vector<16x256xf32>
    %7 = tpu.matmul %3, %6, %cst_6 {dimension_numbers = #tpu.dot_dimension_numbers<[1], [0], [0], [1], [0, 0, 1, 1], [], []>} : vector<16x256xf32>, vector<256x256xf32>, vector<16x256xf32> -> vector<16x256xf32>
    %8 = arith.negf %5 : vector<16x256xf32>
    %9 = math.exp %8 : vector<16x256xf32>
    %cst_7 = arith.constant 1.000000e+00 : f32
    %10 = vector.broadcast %cst_7 : f32 to vector<16x256xf32>
    %11 = arith.addf %10, %9 : vector<16x256xf32>
    %12 = arith.divf %10, %11 : vector<16x256xf32>
    %13 = arith.mulf %5, %12 : vector<16x256xf32>
    %14 = arith.mulf %13, %7 : vector<16x256xf32>
    %c0_8 = arith.constant 0 : index
    %c0_9 = arith.constant 0 : index
    %15 = vector.load %arg7[%c0_8, %c0_9] : memref<16x256xf32, #tpu.memory_space<vmem>>, vector<16x256xf32>
    %c0_10 = arith.constant 0 : index
    %c0_11 = arith.constant 0 : index
    %16 = vector.load %arg5[%c0_10, %c0_11] : memref<256x256xf32, #tpu.memory_space<vmem>>, vector<256x256xf32>
    %cst_12 = arith.constant dense<0.000000e+00> : vector<16x256xf32>
    %17 = tpu.matmul %14, %16, %cst_12 {dimension_numbers = #tpu.dot_dimension_numbers<[1], [0], [0], [1], [0, 0, 1, 1], [], []>} : vector<16x256xf32>, vector<256x256xf32>, vector<16x256xf32> -> vector<16x256xf32>
    %18 = arith.addf %15, %17 : vector<16x256xf32>
    %c0_13 = arith.constant 0 : index
    %c0_14 = arith.constant 0 : index
    %19 = vector.load %arg7[%c0_13, %c0_14] : memref<16x256xf32, #tpu.memory_space<vmem>>, vector<16x256xf32>
    tpu.vector_store %arg7[%c0_13, %c0_14], %18 {strides = array<i32>} : memref<16x256xf32, #tpu.memory_space<vmem>>, vector<16x256xf32>,
    %c1_i32 = arith.constant 1 : i32
    %20 = arith.cmpi eq, %arg1, %c1_i32 : i32
    %21 = arith.extui %20 : i1 to i32
    %c0_i32_15 = arith.constant 0 : i32
    %22 = arith.cmpi ne, %21, %c0_i32_15 : i32
    scf.if %22 {
      %c0_16 = arith.constant 0 : index
      %c0_17 = arith.constant 0 : index
      %23 = vector.load %arg7[%c0_16, %c0_17] : memref<16x256xf32, #tpu.memory_space<vmem>>, vector<16x256xf32>
      %c0_18 = arith.constant 0 : index
      %c0_19 = arith.constant 0 : index
      %24 = vector.load %arg6[%c0_18, %c0_19] : memref<16x256xf32, #tpu.memory_space<vmem>>, vector<16x256xf32>
      tpu.vector_store %arg6[%c0_18, %c0_19], %23 {strides = array<i32>} : memref<16x256xf32, #tpu.memory_space<vmem>>, vector<16x256xf32>,
    } else {
    }
    return
  }
  func.func @transform_0(%arg0: i32, %arg1: i32) -> (i32, i32) {
    %c0_i32 = arith.constant 0 : i32
    %c0_i32_0 = arith.constant 0 : i32
    return %arg0, %c0_i32 : i32, i32
  }
  func.func @transform_1(%arg0: i32, %arg1: i32) -> (i32, i32) {
    %c0_i32 = arith.constant 0 : i32
    %c0_i32_0 = arith.constant 0 : i32
    return %c0_i32, %arg1 : i32, i32
  }
  func.func @transform_2(%arg0: i32, %arg1: i32) -> (i32, i32) {
    %c0_i32 = arith.constant 0 : i32
    %c0_i32_0 = arith.constant 0 : i32
    return %c0_i32, %arg1 : i32, i32
  }
  func.func @transform_3(%arg0: i32, %arg1: i32) -> (i32, i32) {
    %c0_i32 = arith.constant 0 : i32
    %c0_i32_0 = arith.constant 0 : i32
    return %arg1, %c0_i32 : i32, i32
  }
  func.func @transform_4(%arg0: i32, %arg1: i32) -> (i32, i32) {
    %c0_i32 = arith.constant 0 : i32
    %c0_i32_0 = arith.constant 0 : i32
    return %arg0, %c0_i32 : i32, i32
  }
}

</mosaic_0001>

<llo_original>
// kernel: _mlp_call.1
$region0: #{_mlp_call.1}
  #allocation0 [shape = 'u32[]', space=smem, size = 0x4, offset = 0x4, fixed_abs, tag = 'smem constant byte address 0x4 - core index']
  #allocation1 [shape = 'u32[144,128]{1,0:T(1,128)}', space=vmem, size = 0x12000, scoped, tag = 'internal scratch']
  #allocation2 [shape = 'f32[16,256]{1,0:T(8,128)}', space=vmem, size = 0x4000, scoped, tag = 'scratch operand']
  %s0 = inlined_call_operand.vmem [shape: f32[16,256], index: 0, kind: input, shape index: {}]
  %s1 = inlined_call_operand.hbm [shape: f32[256,512], index: 1, kind: input, shape index: {}]
  %s2 = inlined_call_operand.hbm [shape: f32[256,512], index: 2, kind: input, shape index: {}]
  %s3 = inlined_call_operand.hbm [shape: f32[512,256], index: 3, kind: input, shape index: {}]
  %s4 = inlined_call_operand.hbm [shape: f32[16,256], index: 4, kind: output, shape index: {}]
  %s5 = sld [smem:[#allocation0]]
  $region69: #{_mlp_call.1} parent=0
    _
  %s7 = ssub.s32 1, %s5
  %s8 = scalar_select 0, %s7, %s5
  $region1: #{_mlp_call.1} parent=0
    #allocation3 [shape = 'u8[524288]{0}', space=vmem, size = 0x80000, scoped, tag = 'input window, operand 1']
    #allocation4 [shape = 's32[2]{0}', space=sflag, size = 0x8, scoped, tag = 'scoped memory for _mlp_call.1']
    #allocation5 [shape = 's32[2]{0}', space=sflag, size = 0x8, scoped, tag = 'scoped memory for _mlp_call.1']
    #allocation6 [shape = 'u8[524288]{0}', space=vmem, size = 0x80000, scoped, tag = 'input window, operand 2']
    #allocation7 [shape = 's32[2]{0}', space=sflag, size = 0x8, scoped, tag = 'scoped memory for _mlp_call.1']
    #allocation8 [shape = 'u8[524288]{0}', space=vmem, size = 0x80000, scoped, tag = 'input window, operand 3']
    #allocation9 [shape = 'u8[16384]{0}', space=vmem, size = 0x4000, scoped, tag = 'output window, operand 0, single buffered']
    %9 = vsyncpa [#allocation4], 0
    %s10 = scalar_lea.sflag [#allocation4], 1
    %11 = vsyncpa %s10, 0
    %12 = vsyncpa [#allocation7], 0
    %s13 = scalar_lea.sflag [#allocation7], 1
    %14 = vsyncpa %s13, 0
    %15 = vsyncpa [#allocation5], 0
    loop: start=0, step=1, limit=4
    $region2: #{_mlp_call.1} parent=1 // loop_pre_header
      _
    $region3: #{_mlp_call.1} parent=1 // loop_header
      %s17 = sphi 0, %s21
      %p18 = scmp.ge.s32.totalorder %s17, 4
      %s24 = sphi 0, %s36
      %s25 = sphi 0, %s32
      %s26 = sphi 0, %s24
      %s27 = sphi 0, %s25
      %s28 = sphi 0, %s26
      %s29 = sphi 0, %s27
      %s39 = sphi 0, %s41
      %s42 = sphi 0, %s39
      %s43 = sphi 0, %s42
      %s59 = sphi 0, %s43
      %s65 = sphi 0, %s67
      %s68 = sphi 0, %s65
      %s69 = sphi 0, %s68
      %s85 = sphi 0, %s69
      %s91 = sphi 0, %s93
      %s94 = sphi 0, %s91
      %s95 = sphi 0, %s94
      %s111 = sphi 0, %s95
      %s117 = sphi 0, %s119
      %s120 = sphi 0, %s117
      %s121 = sphi 0, %s120
      %s137 = sphi 0, %s121
      %s143 = sphi 0, %s145
      %s146 = sphi 0, %s143
      %s147 = sphi 0, %s146
      %s163 = sphi 0, %s147
    $region4: #{_mlp_call.1} parent=1 // loop_header_branch
      %20 = sbr.rel (%p18) target = $region8
    $region5: #{_mlp_call.1} parent=1 // loop_body
      %s22 = ssub.s32 %s17, 1
      %s23 = ssub.s32 %s17, 2
      %s30 = sadd.s32 1, %s25
      %p31 = scmp.ge.s32.totalorder %s30, 2
      %s32 = scalar_select %p31, 0, %s30
      %s33 = sadd.s32 1, %s24
      %s34 = scalar_select %p31, %s33, %s24
      %p35 = scmp.ge.s32.totalorder %s34, 1
      %s36 = scalar_select %p35, 0, %s34
      %s37 = ssub.s32 %s24, %s36
      %p38 = scmp.eq.s32.totalorder %s37, 0
      %s40 = sadd.s32 %s39, 1
      %s41 = scalar_select %p38, %s39, %s40
      %p44 = pneg %p38
      %p45 = scmp.eq.s32.totalorder %s17, 1
      %p46 = por %p44, %p45
      %p47 = scmp.ne.s32.totalorder %s39, %s42
      %p48 = scmp.eq.s32.totalorder %s17, 0
      %p49 = por %p47, %p48
      %p50 = scmp.ne.s32.totalorder %s39, %s42
      %p51 = scmp.eq.s32.totalorder %s22, 1
      %p52 = por %p50, %p51
      %p53 = scmp.ne.s32.totalorder %s42, %s43
      %p54 = scmp.eq.s32.totalorder %s22, 0
      %p55 = por %p53, %p54
      %p56 = scmp.ne.s32.totalorder %s42, %s43
      %p57 = scmp.eq.s32.totalorder %s23, 1
      %p58 = por %p56, %p57
      %p60 = scmp.ne.s32.totalorder %s43, %s59
      %p61 = scmp.eq.s32.totalorder %s23, 0
      %p62 = por %p60, %p61
      %s63 = ssub.s32 %s25, %s32
      %p64 = scmp.eq.s32.totalorder %s63, 0
      %s66 = sadd.s32 %s65, 1
      %s67 = scalar_select %p64, %s65, %s66
      %p70 = pneg %p64
      %p71 = scmp.eq.s32.totalorder %s17, 1
      %p72 = por %p70, %p71
      %p73 = scmp.ne.s32.totalorder %s65, %s68
      %p74 = scmp.eq.s32.totalorder %s17, 0
      %p75 = por %p73, %p74
      %p76 = scmp.ne.s32.totalorder %s65, %s68
      %p77 = scmp.eq.s32.totalorder %s22, 1
      %p78 = por %p76, %p77
      %p79 = scmp.ne.s32.totalorder %s68, %s69
      %p80 = scmp.eq.s32.totalorder %s22, 0
      %p81 = por %p79, %p80
      %p82 = scmp.ne.s32.totalorder %s68, %s69
      %p83 = scmp.eq.s32.totalorder %s23, 1
      %p84 = por %p82, %p83
      %p86 = scmp.ne.s32.totalorder %s69, %s85
      %p87 = scmp.eq.s32.totalorder %s23, 0
      %p88 = por %p86, %p87
      %s89 = ssub.s32 %s25, %s32
      %p90 = scmp.eq.s32.totalorder %s89, 0
      %s92 = sadd.s32 %s91, 1
      %s93 = scalar_select %p90, %s91, %s92
      %p96 = pneg %p90
      %p97 = scmp.eq.s32.totalorder %s17, 1
      %p98 = por %p96, %p97
      %p99 = scmp.ne.s32.totalorder %s91, %s94
      %p100 = scmp.eq.s32.totalorder %s17, 0
      %p101 = por %p99, %p100
      %p102 = scmp.ne.s32.totalorder %s91, %s94
      %p103 = scmp.eq.s32.totalorder %s22, 1
      %p104 = por %p102, %p103
      %p105 = scmp.ne.s32.totalorder %s94, %s95
      %p106 = scmp.eq.s32.totalorder %s22, 0
      %p107 = por %p105, %p106
      %p108 = scmp.ne.s32.totalorder %s94, %s95
      %p109 = scmp.eq.s32.totalorder %s23, 1
      %p110 = por %p108, %p109
      %p112 = scmp.ne.s32.totalorder %s95, %s111
      %p113 = scmp.eq.s32.totalorder %s23, 0
      %p114 = por %p112, %p113
      %s115 = ssub.s32 %s25, %s32
      %p116 = scmp.eq.s32.totalorder %s115, 0
      %s118 = sadd.s32 %s117, 1
      %s119 = scalar_select %p116, %s117, %s118
      %p122 = pneg %p116
      %p123 = scmp.eq.s32.totalorder %s17, 1
      %p124 = por %p122, %p123
      %p125 = scmp.ne.s32.totalorder %s117, %s120
      %p126 = scmp.eq.s32.totalorder %s17, 0
      %p127 = por %p125, %p126
      %p128 = scmp.ne.s32.totalorder %s117, %s120
      %p129 = scmp.eq.s32.totalorder %s22, 1
      %p130 = por %p128, %p129
      %p131 = scmp.ne.s32.totalorder %s120, %s121
      %p132 = scmp.eq.s32.totalorder %s22, 0
      %p133 = por %p131, %p132
      %p134 = scmp.ne.s32.totalorder %s120, %s121
      %p135 = scmp.eq.s32.totalorder %s23, 1
      %p136 = por %p134, %p135
      %p138 = scmp.ne.s32.totalorder %s121, %s137
      %p139 = scmp.eq.s32.totalorder %s23, 0
      %p140 = por %p138, %p139
      %s141 = ssub.s32 %s24, %s36
      %p142 = scmp.eq.s32.totalorder %s141, 0
      %s144 = sadd.s32 %s143, 1
      %s145 = scalar_select %p142, %s143, %s144
      %p148 = pneg %p142
      %p149 = scmp.eq.s32.totalorder %s17, 1
      %p150 = por %p148, %p149
      %p151 = scmp.ne.s32.totalorder %s143, %s146
      %p152 = scmp.eq.s32.totalorder %s17, 0
      %p153 = por %p151, %p152
      %p154 = scmp.ne.s32.totalorder %s143, %s146
      %p155 = scmp.eq.s32.totalorder %s22, 1
      %p156 = por %p154, %p155
      %p157 = scmp.ne.s32.totalorder %s146, %s147
      %p158 = scmp.eq.s32.totalorder %s22, 0
      %p159 = por %p157, %p158
      %p160 = scmp.ne.s32.totalorder %s146, %s147
      %p161 = scmp.eq.s32.totalorder %s23, 1
      %p162 = por %p160, %p161
      %p164 = scmp.ne.s32.totalorder %s147, %s163
      %p165 = scmp.eq.s32.totalorder %s23, 0
      %p166 = por %p164, %p165
      %p167 = scmp.le.s32.totalorder 1, %s17
      %p168 = scmp.lt.s32.totalorder %s17, 3
      %p169 = pnand %p167, %p168
      %p170 = pneg %p169
      // Predicated region
      $region9: #{_mlp_call.1} parent=5 // pred_check
        _
      $region10: #{_mlp_call.1} parent=5 // pred_check_branch
        %172 = sbr.rel (%p169) target = $region12
      $region11: #{_mlp_call.1} parent=5 // pred_region
        %s173 = ssub.s32 %s17, 1
        // Predicated region
        $region13: #{_mlp_call.1} parent=11 // pred_check
          %p174 = pneg %p55
        $region14: #{_mlp_call.1} parent=11 // pred_check_branch
          %176 = sbr.rel (%p174) target = $region16
        $region15: #{_mlp_call.1} parent=11 // pred_region
          %s177 = smul.u32 2, %s26
          %p178 = scmp.lt.s32.totalorder %s177, 1
          %s179 = scalar_select %p178, %s177, 1
          %s180 = smul.addr %s179, 2
          %s181 = smul.addr %s180, 8
          %s182 = scalar_lea.vmem %s0, %s181
          %s183 = smul.u32 2, %s26
        $region16: #{_mlp_call.1} parent=11 // pred_fallthru
          _
      $region12: #{_mlp_call.1} parent=5 // pred_fallthru
        _
      %p184 = scmp.lt.s32.totalorder %s17, 2
      // Predicated region
      $region17: #{_mlp_call.1} parent=5 // pred_check
        %p185 = pneg %p184
      $region18: #{_mlp_call.1} parent=5 // pred_check_branch
        %187 = sbr.rel (%p185) target = $region20
      $region19: #{_mlp_call.1} parent=5 // pred_region
        // Predicated region
        $region21: #{_mlp_call.1} parent=19 // pred_check
          %p188 = pneg %p75
        $region22: #{_mlp_call.1} parent=19 // pred_check_branch
          %190 = sbr.rel (%p188) target = $region24
        $region23: #{_mlp_call.1} parent=19 // pred_region
          %s191 = sand.u32 %s65, 1
          %s192 = scalar_lea.sflag [#allocation4], %s191
          %s193 = sand.u32 %s65, 1
          %s194 = smul.addr %s193, 512
          %s195 = scalar_lea.vmem [#allocation3], %s194
          %s196 = smul.u32 2, %s25
          %s198 = ssub.s32 8192, 8192
          %199 = vsyncadd %s192, %s198
          %s200 = smul.addr %s196, 128
          %s201 = scalar_lea.hbm %s1, %s200
          %s202 = sshll.u32 %s195, 4
          %s203 = int_to_ptr.vmem [resolvable:$true] %s202
          %208 = dma.hbm_to_vmem [thread:$0]  %s201, 8192, %s203, %s192, 512, 256, 16
        $region24: #{_mlp_call.1} parent=19 // pred_fallthru
          _
        // Predicated region
        $region25: #{_mlp_call.1} parent=19 // pred_check
          %p209 = pneg %p101
        $region26: #{_mlp_call.1} parent=19 // pred_check_branch
          %211 = sbr.rel (%p209) target = $region28
        $region27: #{_mlp_call.1} parent=19 // pred_region
          %s212 = sand.u32 %s17, 1
          %s213 = scalar_lea.sflag [#allocation7], %s212
          %s214 = sand.u32 %s91, 1
          %s215 = smul.addr %s214, 512
          %s216 = scalar_lea.vmem [#allocation6], %s215
          %s217 = smul.u32 2, %s25
          %s219 = ssub.s32 8192, 8192
          %220 = vsyncadd %s213, %s219
          %s221 = smul.addr %s217, 128
          %s222 = scalar_lea.hbm %s2, %s221
          %s223 = sshll.u32 %s216, 4
          %s224 = int_to_ptr.vmem [resolvable:$true] %s223
          %229 = dma.hbm_to_vmem [thread:$0]  %s222, 8192, %s224, %s213, 512, 256, 16
        $region28: #{_mlp_call.1} parent=19 // pred_fallthru
          _
        // Predicated region
        $region29: #{_mlp_call.1} parent=19 // pred_check
          %p230 = pneg %p127
        $region30: #{_mlp_call.1} parent=19 // pred_check_branch
          %232 = sbr.rel (%p230) target = $region32
        $region31: #{_mlp_call.1} parent=19 // pred_region
          %s233 = sand.u32 %s17, 1
          %s234 = scalar_lea.sflag [#allocation7], %s233
          %s235 = sand.u32 %s117, 1
          %s236 = smul.addr %s235, 512
          %s237 = scalar_lea.vmem [#allocation8], %s236
          %s238 = smul.u32 32, %s25
          %s240 = ssub.s32 8192, 8192
          %241 = vsyncadd %s234, %s240
          %s242 = smul.addr %s238, 2
          %s243 = smul.addr %s242, 128
          %s244 = scalar_lea.hbm %s3, %s243
          %s245 = sshll.u32 %s237, 4
          %s246 = int_to_ptr.vmem [resolvable:$true] %s245
          %251 = dma.hbm_to_vmem [thread:$0]  %s244, 8192, %s246, %s234, 256, 256, 16
        $region32: #{_mlp_call.1} parent=19 // pred_fallthru
          _
      $region20: #{_mlp_call.1} parent=5 // pred_fallthru
        _
      %p252 = scmp.le.s32.totalorder 1, %s17
      %p253 = scmp.lt.s32.totalorder %s17, 3
      %p254 = pnand %p252, %p253
      %p255 = pneg %p254
      // Predicated region
      $region33: #{_mlp_call.1} parent=5 // pred_check
        _
      $region34: #{_mlp_call.1} parent=5 // pred_check_branch
        %257 = sbr.rel (%p254) target = $region36
      $region35: #{_mlp_call.1} parent=5 // pred_region
        %s258 = ssub.s32 %s17, 1
        %s259 = sand.u32 %s68, 1
        %s260 = scalar_lea.sflag [#allocation4], %s259
        %s261 = sand.u32 %s68, 1
        %s262 = smul.addr %s261, 512
        %s263 = scalar_lea.vmem [#allocation3], %s262
        // Predicated region
        $region37: #{_mlp_call.1} parent=35 // pred_check
          %p264 = pneg %p81
        $region38: #{_mlp_call.1} parent=35 // pred_check_branch
          %266 = sbr.rel (%p264) target = $region40
        $region39: #{_mlp_call.1} parent=35 // pred_region
          %267 = dma.done %s260, 8192
        $region40: #{_mlp_call.1} parent=35 // pred_fallthru
          _
        %s268 = sand.u32 %s22, 1
        %s269 = scalar_lea.sflag [#allocation7], %s268
        %s270 = sand.u32 %s94, 1
        %s271 = smul.addr %s270, 512
        %s272 = scalar_lea.vmem [#allocation6], %s271
        // Predicated region
        $region41: #{_mlp_call.1} parent=35 // pred_check
          %p273 = pneg %p107
        $region42: #{_mlp_call.1} parent=35 // pred_check_branch
          %275 = sbr.rel (%p273) target = $region44
        $region43: #{_mlp_call.1} parent=35 // pred_region
          %276 = dma.done %s269, 8192
        $region44: #{_mlp_call.1} parent=35 // pred_fallthru
          _
        %s277 = sand.u32 %s22, 1
        %s278 = scalar_lea.sflag [#allocation7], %s277
        %s279 = sand.u32 %s120, 1
        %s280 = smul.addr %s279, 512
        %s281 = scalar_lea.vmem [#allocation8], %s280
        // Predicated region
        $region45: #{_mlp_call.1} parent=35 // pred_check
          %p282 = pneg %p133
        $region46: #{_mlp_call.1} parent=35 // pred_check_branch
          %284 = sbr.rel (%p282) target = $region48
        $region47: #{_mlp_call.1} parent=35 // pred_region
          %285 = dma.done %s278, 8192
        $region48: #{_mlp_call.1} parent=35 // pred_fallthru
          _
        %s286 = smul.u32 2, %s26
        %p287 = scmp.lt.s32.totalorder %s286, 1
        %s288 = scalar_select %p287, %s286, 1
        %s289 = smul.addr %s288, 2
        %s290 = smul.addr %s289, 8
        %s291 = scalar_lea.vmem %s0, %s290
        %p292 = pneg %p55
        %p293 = pneg %p52
        %s294 = sand.u32 %s68, 1
        %s295 = scalar_lea.sflag [#allocation4], %s294
        %s296 = sand.u32 %s68, 1
        %s297 = smul.addr %s296, 512
        %s298 = scalar_lea.vmem [#allocation3], %s297
        %p299 = pneg %p81
        %p300 = pneg %p78
        %s301 = sand.u32 %s22, 1
        %s302 = scalar_lea.sflag [#allocation7], %s301
        %s303 = sand.u32 %s94, 1
        %s304 = smul.addr %s303, 512
        %s305 = scalar_lea.vmem [#allocation6], %s304
        %p306 = pneg %p107
        %p307 = pneg %p104
        %s308 = sand.u32 %s22, 1
        %s309 = scalar_lea.sflag [#allocation7], %s308
        %s310 = sand.u32 %s120, 1
        %s311 = smul.addr %s310, 512
        %s312 = scalar_lea.vmem [#allocation8], %s311
        %p313 = pneg %p133
        %p314 = pneg %p130
        %p315 = pneg %p159
        %p316 = pneg %p156
        %s317 = smul.u32 2, %s26
        %p318 = scmp.lt.s32.totalorder %s317, 1
        %s319 = scalar_select %p318, %s317, 1
        %s320 = smul.addr %s319, 2
        %s321 = smul.addr %s320, 8
        %s322 = scalar_lea.vmem %s0, %s321
        %s323 = smul.u32 2, %s26
        %s324 = smul.u32 2, %s27
        %s325 = smul.u32 2, %s27
        %s326 = smul.u32 32, %s27
        %s327 = smul.u32 2, %s26
        %p328 = scmp.eq.s32.totalorder %s27, 0
        // Predicated region
        $region49: #{_mlp_call.1} parent=35 // pred_check
          %p329 = pneg %p328
        $region50: #{_mlp_call.1} parent=35 // pred_check_branch
          %331 = sbr.rel (%p329) target = $region52
        $region51: #{_mlp_call.1} parent=35 // pred_region
          %332 = vst [vmem:[#allocation2] sm:$0xff] 0.0
          %333 = vst [vmem:[#allocation2 + $0x8] sm:$0xff] 0.0
          %334 = vst [vmem:[#allocation2 + $0x10] sm:$0xff] 0.0
          %335 = vst [vmem:[#allocation2 + $0x18] sm:$0xff] 0.0
        $region52: #{_mlp_call.1} parent=35 // pred_fallthru
          _
        %v336 = vld [vmem:[%s322] sm:$0xff]
        %v337 = vld [vmem:[%s322 + $0x8] sm:$0xff]
        %v338 = vld [vmem:[%s322 + $0x10] sm:$0xff]
        %v339 = vld [vmem:[%s322 + $0x18] sm:$0xff]
        %v340 = vld [vmem:[%s263] sm:$0xff]
        %v341 = vld [vmem:[%s263 + $0x8] sm:$0xff]
        %v342 = vld [vmem:[%s263 + $0x10] sm:$0xff]
        %v343 = vld [vmem:[%s263 + $0x18] sm:$0xff]
        %v344 = vld [vmem:[%s263 + $0x20] sm:$0xff]
        %v345 = vld [vmem:[%s263 + $0x28] sm:$0xff]
        %v346 = vld [vmem:[%s263 + $0x30] sm:$0xff]
        %v347 = vld [vmem:[%s263 + $0x38] sm:$0xff]
        %v348 = vld [vmem:[%s263 + $0x40] sm:$0xff]
        %v349 = vld [vmem:[%s263 + $0x48] sm:$0xff]
        %v350 = vld [vmem:[%s263 + $0x50] sm:$0xff]
        %v351 = vld [vmem:[%s263 + $0x58] sm:$0xff]
        %v352 = vld [vmem:[%s263 + $0x60] sm:$0xff]
        %v353 = vld [vmem:[%s263 + $0x68] sm:$0xff]
        %v354 = vld [vmem:[%s263 + $0x70] sm:$0xff]
        %v355 = vld [vmem:[%s263 + $0x78] sm:$0xff]
        %v356 = vld [vmem:[%s263 + $0x80] sm:$0xff]
        %v357 = vld [vmem:[%s263 + $0x88] sm:$0xff]
        %v358 = vld [vmem:[%s263 + $0x90] sm:$0xff]
        %v359 = vld [vmem:[%s263 + $0x98] sm:$0xff]
        %v360 = vld [vmem:[%s263 + $0xa0] sm:$0xff]
        %v361 = vld [vmem:[%s263 + $0xa8] sm:$0xff]
        %v362 = vld [vmem:[%s263 + $0xb0] sm:$0xff]
        %v363 = vld [vmem:[%s263 + $0xb8] sm:$0xff]
        %v364 = vld [vmem:[%s263 + $0xc0] sm:$0xff]
        %v365 = vld [vmem:[%s263 + $0xc8] sm:$0xff]
        %v366 = vld [vmem:[%s263 + $0xd0] sm:$0xff]
        %v367 = vld [vmem:[%s263 + $0xd8] sm:$0xff]
        %v368 = vld [vmem:[%s263 + $0xe0] sm:$0xff]
        %v369 = vld [vmem:[%s263 + $0xe8] sm:$0xff]
        %v370 = vld [vmem:[%s263 + $0xf0] sm:$0xff]
        %v371 = vld [vmem:[%s263 + $0xf8] sm:$0xff]
        %v372 = vld [vmem:[%s263 + $0x100] sm:$0xff]
        %v373 = vld [vmem:[%s263 + $0x108] sm:$0xff]
        %v374 = vld [vmem:[%s263 + $0x110] sm:$0xff]
        %v375 = vld [vmem:[%s263 + $0x118] sm:$0xff]
        %v376 = vld [vmem:[%s263 + $0x120] sm:$0xff]
        %v377 = vld [vmem:[%s263 + $0x128] sm:$0xff]
        %v378 = vld [vmem:[%s263 + $0x130] sm:$0xff]
        %v379 = vld [vmem:[%s263 + $0x138] sm:$0xff]
        %v380 = vld [vmem:[%s263 + $0x140] sm:$0xff]
        %v381 = vld [vmem:[%s263 + $0x148] sm:$0xff]
        %v382 = vld [vmem:[%s263 + $0x150] sm:$0xff]
        %v383 = vld [vmem:[%s263 + $0x158] sm:$0xff]
        %v384 = vld [vmem:[%s263 + $0x160] sm:$0xff]
        %v385 = vld [vmem:[%s263 + $0x168] sm:$0xff]
        %v386 = vld [vmem:[%s263 + $0x170] sm:$0xff]
        %v387 = vld [vmem:[%s263 + $0x178] sm:$0xff]
        %v388 = vld [vmem:[%s263 + $0x180] sm:$0xff]
        %v389 = vld [vmem:[%s263 + $0x188] sm:$0xff]
        %v390 = vld [vmem:[%s263 + $0x190] sm:$0xff]
        %v391 = vld [vmem:[%s263 + $0x198] sm:$0xff]
        %v392 = vld [vmem:[%s263 + $0x1a0] sm:$0xff]
        %v393 = vld [vmem:[%s263 + $0x1a8] sm:$0xff]
        %v394 = vld [vmem:[%s263 + $0x1b0] sm:$0xff]
        %v395 = vld [vmem:[%s263 + $0x1b8] sm:$0xff]
        %v396 = vld [vmem:[%s263 + $0x1c0] sm:$0xff]
        %v397 = vld [vmem:[%s263 + $0x1c8] sm:$0xff]
        %v398 = vld [vmem:[%s263 + $0x1d0] sm:$0xff]
        %v399 = vld [vmem:[%s263 + $0x1d8] sm:$0xff]
        %v400 = vld [vmem:[%s263 + $0x1e0] sm:$0xff]
        %v401 = vld [vmem:[%s263 + $0x1e8] sm:$0xff]
        %v402 = vld [vmem:[%s263 + $0x1f0] sm:$0xff]
        %v403 = vld [vmem:[%s263 + $0x1f8] sm:$0xff]
        %404 = vmatprep.subr.mxu0 %v341
        %405 = vmatpush1.msra.mxu0 %v340
        %406 = vmatprep.subr.mxu0 %v343
        %407 = vmatpush1.msra.mxu0 %v342
        %408 = vmatprep.subr.mxu0 %v345
        %409 = vmatpush1.msra.mxu0 %v344
        %410 = vmatprep.subr.mxu0 %v347
        %411 = vmatpush1.msra.mxu0 %v346
        %412 = vmatprep.subr.mxu0 %v349
        %413 = vmatpush1.msra.mxu0 %v348
        %414 = vmatprep.subr.mxu0 %v351
        %415 = vmatpush1.msra.mxu0 %v350
        %416 = vmatprep.subr.mxu0 %v353
        %417 = vmatpush1.msra.mxu0 %v352
        %418 = vmatprep.subr.mxu0 %v355
        %419 = vmatpush1.msra.mxu0 %v354
        %420 = vmatprep.subr.mxu0 %v357
        %421 = vmatpush1.msra.mxu0 %v356
        %422 = vmatprep.subr.mxu0 %v359
        %423 = vmatpush1.msra.mxu0 %v358
        %424 = vmatprep.subr.mxu0 %v361
        %425 = vmatpush1.msra.mxu0 %v360
        %426 = vmatprep.subr.mxu0 %v363
        %427 = vmatpush1.msra.mxu0 %v362
        %428 = vmatprep.subr.mxu0 %v365
        %429 = vmatpush1.msra.mxu0 %v364
        %430 = vmatprep.subr.mxu0 %v367
        %431 = vmatpush1.msra.mxu0 %v366
        %432 = vmatprep.subr.mxu0 %v369
        %433 = vmatpush1.msra.mxu0 %v368
        %434 = vmatprep.subr.mxu0 %v371
        %435 = vmatpush1.msra.mxu0 %v370
        %436 = vmatprep.subr.mxu0 %v373
        %437 = vmatpush1.msra.mxu0 %v372
        %438 = vmatprep.subr.mxu0 %v375
        %439 = vmatpush1.msra.mxu0 %v374
        %440 = vmatprep.subr.mxu0 %v377
        %441 = vmatpush1.msra.mxu0 %v376
        %442 = vmatprep.subr.mxu0 %v379
        %443 = vmatpush1.msra.mxu0 %v378
        %444 = vmatprep.subr.mxu0 %v381
        %445 = vmatpush1.msra.mxu0 %v380
        %446 = vmatprep.subr.mxu0 %v383
        %447 = vmatpush1.msra.mxu0 %v382
        %448 = vmatprep.subr.mxu0 %v385
        %449 = vmatpush1.msra.mxu0 %v384
        %450 = vmatprep.subr.mxu0 %v387
        %451 = vmatpush1.msra.mxu0 %v386
        %452 = vmatprep.subr.mxu0 %v389
        %453 = vmatpush1.msra.mxu0 %v388
        %454 = vmatprep.subr.mxu0 %v391
        %455 = vmatpush1.msra.mxu0 %v390
        %456 = vmatprep.subr.mxu0 %v393
        %457 = vmatpush1.msra.mxu0 %v392
        %458 = vmatprep.subr.mxu0 %v395
        %459 = vmatpush1.msra.mxu0 %v394
        %460 = vmatprep.subr.mxu0 %v397
        %461 = vmatpush1.msra.mxu0 %v396
        %462 = vmatprep.subr.mxu0 %v399
        %463 = vmatpush1.msra.mxu0 %v398
        %464 = vmatprep.subr.mxu0 %v401
        %465 = vmatpush1.msra.mxu0 %v400
        %466 = vmatprep.subr.mxu0 %v403
        %467 = vmatpush1.msra.mxu0 %v402
        %468 = vmatprep.mubr.f32.mxu0 %v337
        %469 = vmatmul.mubr.f32.gmra.mrb[0].mxu0 %v336
        %v470 = vpop.f32.mrb[0].mxu0
        %v471 = vadd.f32 0.0, %v470
        %v472 = vpop.f32.mrb[0].mxu0
        %v473 = vadd.f32 0.0, %v472
        %474 = vmatprep.mubr.f32.mxu0 %v339
        %475 = vmatmul.mubr.f32.gmra.mrb[0].mxu0 %v338
        %v476 = vpop.f32.mrb[0].mxu0
        %v477 = vadd.f32 0.0, %v476
        %v478 = vpop.f32.mrb[0].mxu0
        %v479 = vadd.f32 0.0, %v478
        %480 = vdwg.mxu0
        %v481 = vld [vmem:[%s272] sm:$0xff]
        %v482 = vld [vmem:[%s272 + $0x8] sm:$0xff]
        %v483 = vld [vmem:[%s272 + $0x10] sm:$0xff]
        %v484 = vld [vmem:[%s272 + $0x18] sm:$0xff]
        %v485 = vld [vmem:[%s272 + $0x20] sm:$0xff]
        %v486 = vld [vmem:[%s272 + $0x28] sm:$0xff]
        %v487 = vld [vmem:[%s272 + $0x30] sm:$0xff]
        %v488 = vld [vmem:[%s272 + $0x38] sm:$0xff]
        %v489 = vld [vmem:[%s272 + $0x40] sm:$0xff]
        %v490 = vld [vmem:[%s272 + $0x48] sm:$0xff]
        %v491 = vld [vmem:[%s272 + $0x50] sm:$0xff]
        %v492 = vld [vmem:[%s272 + $0x58] sm:$0xff]
        %v493 = vld [vmem:[%s272 + $0x60] sm:$0xff]
        %v494 = vld [vmem:[%s272 + $0x68] sm:$0xff]
        %v495 = vld [vmem:[%s272 + $0x70] sm:$0xff]
        %v496 = vld [vmem:[%s272 + $0x78] sm:$0xff]
        %v497 = vld [vmem:[%s272 + $0x80] sm:$0xff]
        %v498 = vld [vmem:[%s272 + $0x88] sm:$0xff]
        %v499 = vld [vmem:[%s272 + $0x90] sm:$0xff]
        %v500 = vld [vmem:[%s272 + $0x98] sm:$0xff]
        %v501 = vld [vmem:[%s272 + $0xa0] sm:$0xff]
        %v502 = vld [vmem:[%s272 + $0xa8] sm:$0xff]
        %v503 = vld [vmem:[%s272 + $0xb0] sm:$0xff]
        %v504 = vld [vmem:[%s272 + $0xb8] sm:$0xff]
        %v505 = vld [vmem:[%s272 + $0xc0] sm:$0xff]
        %v506 = vld [vmem:[%s272 + $0xc8] sm:$0xff]
        %v507 = vld [vmem:[%s272 + $0xd0] sm:$0xff]
        %v508 = vld [vmem:[%s272 + $0xd8] sm:$0xff]
        %v509 = vld [vmem:[%s272 + $0xe0] sm:$0xff]
        %v510 = vld [vmem:[%s272 + $0xe8] sm:$0xff]
        %v511 = vld [vmem:[%s272 + $0xf0] sm:$0xff]
        %v512 = vld [vmem:[%s272 + $0xf8] sm:$0xff]
        %v513 = vld [vmem:[%s272 + $0x100] sm:$0xff]
        %v514 = vld [vmem:[%s272 + $0x108] sm:$0xff]
        %v515 = vld [vmem:[%s272 + $0x110] sm:$0xff]
        %v516 = vld [vmem:[%s272 + $0x118] sm:$0xff]
        %v517 = vld [vmem:[%s272 + $0x120] sm:$0xff]
        %v518 = vld [vmem:[%s272 + $0x128] sm:$0xff]
        %v519 = vld [vmem:[%s272 + $0x130] sm:$0xff]
        %v520 = vld [vmem:[%s272 + $0x138] sm:$0xff]
        %v521 = vld [vmem:[%s272 + $0x140] sm:$0xff]
        %v522 = vld [vmem:[%s272 + $0x148] sm:$0xff]
        %v523 = vld [vmem:[%s272 + $0x150] sm:$0xff]
        %v524 = vld [vmem:[%s272 + $0x158] sm:$0xff]
        %v525 = vld [vmem:[%s272 + $0x160] sm:$0xff]
        %v526 = vld [vmem:[%s272 + $0x168] sm:$0xff]
        %v527 = vld [vmem:[%s272 + $0x170] sm:$0xff]
        %v528 = vld [vmem:[%s272 + $0x178] sm:$0xff]
        %v529 = vld [vmem:[%s272 + $0x180] sm:$0xff]
        %v530 = vld [vmem:[%s272 + $0x188] sm:$0xff]
        %v531 = vld [vmem:[%s272 + $0x190] sm:$0xff]
        %v532 = vld [vmem:[%s272 + $0x198] sm:$0xff]
        %v533 = vld [vmem:[%s272 + $0x1a0] sm:$0xff]
        %v534 = vld [vmem:[%s272 + $0x1a8] sm:$0xff]
        %v535 = vld [vmem:[%s272 + $0x1b0] sm:$0xff]
        %v536 = vld [vmem:[%s272 + $0x1b8] sm:$0xff]
        %v537 = vld [vmem:[%s272 + $0x1c0] sm:$0xff]
        %v538 = vld [vmem:[%s272 + $0x1c8] sm:$0xff]
        %v539 = vld [vmem:[%s272 + $0x1d0] sm:$0xff]
        %v540 = vld [vmem:[%s272 + $0x1d8] sm:$0xff]
        %v541 = vld [vmem:[%s272 + $0x1e0] sm:$0xff]
        %v542 = vld [vmem:[%s272 + $0x1e8] sm:$0xff]
        %v543 = vld [vmem:[%s272 + $0x1f0] sm:$0xff]
        %v544 = vld [vmem:[%s272 + $0x1f8] sm:$0xff]
        %545 = vmatprep.subr.mxu0 %v482
        %546 = vmatpush1.msra.mxu0 %v481
        %547 = vmatprep.subr.mxu0 %v484
        %548 = vmatpush1.msra.mxu0 %v483
        %549 = vmatprep.subr.mxu0 %v486
        %550 = vmatpush1.msra.mxu0 %v485
        %551 = vmatprep.subr.mxu0 %v488
        %552 = vmatpush1.msra.mxu0 %v487
        %553 = vmatprep.subr.mxu0 %v490
        %554 = vmatpush1.msra.mxu0 %v489
        %555 = vmatprep.subr.mxu0 %v492
        %556 = vmatpush1.msra.mxu0 %v491
        %557 = vmatprep.subr.mxu0 %v494
        %558 = vmatpush1.msra.mxu0 %v493
        %559 = vmatprep.subr.mxu0 %v496
        %560 = vmatpush1.msra.mxu0 %v495
        %561 = vmatprep.subr.mxu0 %v498
        %562 = vmatpush1.msra.mxu0 %v497
        %563 = vmatprep.subr.mxu0 %v500
        %564 = vmatpush1.msra.mxu0 %v499
        %565 = vmatprep.subr.mxu0 %v502
        %566 = vmatpush1.msra.mxu0 %v501
        %567 = vmatprep.subr.mxu0 %v504
        %568 = vmatpush1.msra.mxu0 %v503
        %569 = vmatprep.subr.mxu0 %v506
        %570 = vmatpush1.msra.mxu0 %v505
        %571 = vmatprep.subr.mxu0 %v508
        %572 = vmatpush1.msra.mxu0 %v507
        %573 = vmatprep.subr.mxu0 %v510
        %574 = vmatpush1.msra.mxu0 %v509
        %575 = vmatprep.subr.mxu0 %v512
        %576 = vmatpush1.msra.mxu0 %v511
        %577 = vmatprep.subr.mxu0 %v514
        %578 = vmatpush1.msra.mxu0 %v513
        %579 = vmatprep.subr.mxu0 %v516
        %580 = vmatpush1.msra.mxu0 %v515
        %581 = vmatprep.subr.mxu0 %v518
        %582 = vmatpush1.msra.mxu0 %v517
        %583 = vmatprep.subr.mxu0 %v520
        %584 = vmatpush1.msra.mxu0 %v519
        %585 = vmatprep.subr.mxu0 %v522
        %586 = vmatpush1.msra.mxu0 %v521
        %587 = vmatprep.subr.mxu0 %v524
        %588 = vmatpush1.msra.mxu0 %v523
        %589 = vmatprep.subr.mxu0 %v526
        %590 = vmatpush1.msra.mxu0 %v525
        %591 = vmatprep.subr.mxu0 %v528
        %592 = vmatpush1.msra.mxu0 %v527
        %593 = vmatprep.subr.mxu0 %v530
        %594 = vmatpush1.msra.mxu0 %v529
        %595 = vmatprep.subr.mxu0 %v532
        %596 = vmatpush1.msra.mxu0 %v531
        %597 = vmatprep.subr.mxu0 %v534
        %598 = vmatpush1.msra.mxu0 %v533
        %599 = vmatprep.subr.mxu0 %v536
        %600 = vmatpush1.msra.mxu0 %v535
        %601 = vmatprep.subr.mxu0 %v538
        %602 = vmatpush1.msra.mxu0 %v537
        %603 = vmatprep.subr.mxu0 %v540
        %604 = vmatpush1.msra.mxu0 %v539
        %605 = vmatprep.subr.mxu0 %v542
        %606 = vmatpush1.msra.mxu0 %v541
        %607 = vmatprep.subr.mxu0 %v544
        %608 = vmatpush1.msra.mxu0 %v543
        %609 = vmatprep.mubr.f32.mxu0 %v337
        %610 = vmatmul.mubr.f32.gmra.mrb[0].mxu0 %v336
        %v611 = vpop.f32.mrb[0].mxu0
        %v612 = vadd.f32 0.0, %v611
        %v613 = vpop.f32.mrb[0].mxu0
        %v614 = vadd.f32 0.0, %v613
        %615 = vmatprep.mubr.f32.mxu0 %v339
        %616 = vmatmul.mubr.f32.gmra.mrb[0].mxu0 %v338
        %v617 = vpop.f32.mrb[0].mxu0
        %v618 = vadd.f32 0.0, %v617
        %v619 = vpop.f32.mrb[0].mxu0
        %v620 = vadd.f32 0.0, %v619
        %621 = vdwg.mxu0
        %v622 = vxor.u32 %v471, 2147483648
        %v623 = vxor.u32 %v473, 2147483648
        %v624 = vxor.u32 %v477, 2147483648
        %v625 = vxor.u32 %v479, 2147483648
        %v626 = vmul.f32 %v622, 1.442695
        %v627 = vpow.pop %v626
        %v628 = vmul.f32 %v623, 1.442695
        %v629 = vpow.pop %v628
        %v630 = vmul.f32 %v624, 1.442695
        %v631 = vpow.pop %v630
        %v632 = vmul.f32 %v625, 1.442695
        %v633 = vpow.pop %v632
        %v634 = vadd.f32 %v627, 1.0
        %v635 = vadd.f32 %v629, 1.0
        %v636 = vadd.f32 %v631, 1.0
        %v637 = vadd.f32 %v633, 1.0
        %v638 = vrcp.pop %v634
        %v639 = vmul.f32 1.0, %v638
        %v640 = vrcp.pop %v635
        %v641 = vmul.f32 1.0, %v640
        %v642 = vrcp.pop %v636
        %v643 = vmul.f32 1.0, %v642
        %v644 = vrcp.pop %v637
        %v645 = vmul.f32 1.0, %v644
        %v646 = vmul.f32 %v471, %v639
        %v647 = vmul.f32 %v473, %v641
        %v648 = vmul.f32 %v477, %v643
        %v649 = vmul.f32 %v479, %v645
        %v650 = vmul.f32 %v646, %v612
        %v651 = vmul.f32 %v647, %v614
        %v652 = vmul.f32 %v648, %v618
        %v653 = vmul.f32 %v649, %v620
        %v654 = vld [vmem:[#allocation2] sm:$0xff]
        %v655 = vld [vmem:[#allocation2 + $0x8] sm:$0xff]
        %v656 = vld [vmem:[#allocation2 + $0x10] sm:$0xff]
        %v657 = vld [vmem:[#allocation2 + $0x18] sm:$0xff]
        %v658 = vld [vmem:[%s281] sm:$0xff]
        %v659 = vld [vmem:[%s281 + $0x8] sm:$0xff]
        %v660 = vld [vmem:[%s281 + $0x10] sm:$0xff]
        %v661 = vld [vmem:[%s281 + $0x18] sm:$0xff]
        %v662 = vld [vmem:[%s281 + $0x20] sm:$0xff]
        %v663 = vld [vmem:[%s281 + $0x28] sm:$0xff]
        %v664 = vld [vmem:[%s281 + $0x30] sm:$0xff]
        %v665 = vld [vmem:[%s281 + $0x38] sm:$0xff]
        %v666 = vld [vmem:[%s281 + $0x40] sm:$0xff]
        %v667 = vld [vmem:[%s281 + $0x48] sm:$0xff]
        %v668 = vld [vmem:[%s281 + $0x50] sm:$0xff]
        %v669 = vld [vmem:[%s281 + $0x58] sm:$0xff]
        %v670 = vld [vmem:[%s281 + $0x60] sm:$0xff]
        %v671 = vld [vmem:[%s281 + $0x68] sm:$0xff]
        %v672 = vld [vmem:[%s281 + $0x70] sm:$0xff]
        %v673 = vld [vmem:[%s281 + $0x78] sm:$0xff]
        %v674 = vld [vmem:[%s281 + $0x80] sm:$0xff]
        %v675 = vld [vmem:[%s281 + $0x88] sm:$0xff]
        %v676 = vld [vmem:[%s281 + $0x90] sm:$0xff]
        %v677 = vld [vmem:[%s281 + $0x98] sm:$0xff]
        %v678 = vld [vmem:[%s281 + $0xa0] sm:$0xff]
        %v679 = vld [vmem:[%s281 + $0xa8] sm:$0xff]
        %v680 = vld [vmem:[%s281 + $0xb0] sm:$0xff]
        %v681 = vld [vmem:[%s281 + $0xb8] sm:$0xff]
        %v682 = vld [vmem:[%s281 + $0xc0] sm:$0xff]
        %v683 = vld [vmem:[%s281 + $0xc8] sm:$0xff]
        %v684 = vld [vmem:[%s281 + $0xd0] sm:$0xff]
        %v685 = vld [vmem:[%s281 + $0xd8] sm:$0xff]
        %v686 = vld [vmem:[%s281 + $0xe0] sm:$0xff]
        %v687 = vld [vmem:[%s281 + $0xe8] sm:$0xff]
        %v688 = vld [vmem:[%s281 + $0xf0] sm:$0xff]
        %v689 = vld [vmem:[%s281 + $0xf8] sm:$0xff]
        %v690 = vld [vmem:[%s281 + $0x100] sm:$0xff]
        %v691 = vld [vmem:[%s281 + $0x108] sm:$0xff]
        %v692 = vld [vmem:[%s281 + $0x110] sm:$0xff]
        %v693 = vld [vmem:[%s281 + $0x118] sm:$0xff]
        %v694 = vld [vmem:[%s281 + $0x120] sm:$0xff]
        %v695 = vld [vmem:[%s281 + $0x128] sm:$0xff]
        %v696 = vld [vmem:[%s281 + $0x130] sm:$0xff]
        %v697 = vld [vmem:[%s281 + $0x138] sm:$0xff]
        %v698 = vld [vmem:[%s281 + $0x140] sm:$0xff]
        %v699 = vld [vmem:[%s281 + $0x148] sm:$0xff]
        %v700 = vld [vmem:[%s281 + $0x150] sm:$0xff]
        %v701 = vld [vmem:[%s281 + $0x158] sm:$0xff]
        %v702 = vld [vmem:[%s281 + $0x160] sm:$0xff]
        %v703 = vld [vmem:[%s281 + $0x168] sm:$0xff]
        %v704 = vld [vmem:[%s281 + $0x170] sm:$0xff]
        %v705 = vld [vmem:[%s281 + $0x178] sm:$0xff]
        %v706 = vld [vmem:[%s281 + $0x180] sm:$0xff]
        %v707 = vld [vmem:[%s281 + $0x188] sm:$0xff]
        %v708 = vld [vmem:[%s281 + $0x190] sm:$0xff]
        %v709 = vld [vmem:[%s281 + $0x198] sm:$0xff]
        %v710 = vld [vmem:[%s281 + $0x1a0] sm:$0xff]
        %v711 = vld [vmem:[%s281 + $0x1a8] sm:$0xff]
        %v712 = vld [vmem:[%s281 + $0x1b0] sm:$0xff]
        %v713 = vld [vmem:[%s281 + $0x1b8] sm:$0xff]
        %v714 = vld [vmem:[%s281 + $0x1c0] sm:$0xff]
        %v715 = vld [vmem:[%s281 + $0x1c8] sm:$0xff]
        %v716 = vld [vmem:[%s281 + $0x1d0] sm:$0xff]
        %v717 = vld [vmem:[%s281 + $0x1d8] sm:$0xff]
        %v718 = vld [vmem:[%s281 + $0x1e0] sm:$0xff]
        %v719 = vld [vmem:[%s281 + $0x1e8] sm:$0xff]
        %v720 = vld [vmem:[%s281 + $0x1f0] sm:$0xff]
        %v721 = vld [vmem:[%s281 + $0x1f8] sm:$0xff]
        %722 = vmatprep.subr.mxu0 %v659
        %723 = vmatpush1.msra.mxu0 %v658
        %724 = vmatprep.subr.mxu0 %v661
        %725 = vmatpush1.msra.mxu0 %v660
        %726 = vmatprep.subr.mxu0 %v663
        %727 = vmatpush1.msra.mxu0 %v662
        %728 = vmatprep.subr.mxu0 %v665
        %729 = vmatpush1.msra.mxu0 %v664
        %730 = vmatprep.subr.mxu0 %v667
        %731 = vmatpush1.msra.mxu0 %v666
        %732 = vmatprep.subr.mxu0 %v669
        %733 = vmatpush1.msra.mxu0 %v668
        %734 = vmatprep.subr.mxu0 %v671
        %735 = vmatpush1.msra.mxu0 %v670
        %736 = vmatprep.subr.mxu0 %v673
        %737 = vmatpush1.msra.mxu0 %v672
        %738 = vmatprep.subr.mxu0 %v675
        %739 = vmatpush1.msra.mxu0 %v674
        %740 = vmatprep.subr.mxu0 %v677
        %741 = vmatpush1.msra.mxu0 %v676
        %742 = vmatprep.subr.mxu0 %v679
        %743 = vmatpush1.msra.mxu0 %v678
        %744 = vmatprep.subr.mxu0 %v681
        %745 = vmatpush1.msra.mxu0 %v680
        %746 = vmatprep.subr.mxu0 %v683
        %747 = vmatpush1.msra.mxu0 %v682
        %748 = vmatprep.subr.mxu0 %v685
        %749 = vmatpush1.msra.mxu0 %v684
        %750 = vmatprep.subr.mxu0 %v687
        %751 = vmatpush1.msra.mxu0 %v686
        %752 = vmatprep.subr.mxu0 %v689
        %753 = vmatpush1.msra.mxu0 %v688
        %754 = vmatprep.subr.mxu0 %v691
        %755 = vmatpush1.msra.mxu0 %v690
        %756 = vmatprep.subr.mxu0 %v693
        %757 = vmatpush1.msra.mxu0 %v692
        %758 = vmatprep.subr.mxu0 %v695
        %759 = vmatpush1.msra.mxu0 %v694
        %760 = vmatprep.subr.mxu0 %v697
        %761 = vmatpush1.msra.mxu0 %v696
        %762 = vmatprep.subr.mxu0 %v699
        %763 = vmatpush1.msra.mxu0 %v698
        %764 = vmatprep.subr.mxu0 %v701
        %765 = vmatpush1.msra.mxu0 %v700
        %766 = vmatprep.subr.mxu0 %v703
        %767 = vmatpush1.msra.mxu0 %v702
        %768 = vmatprep.subr.mxu0 %v705
        %769 = vmatpush1.msra.mxu0 %v704
        %770 = vmatprep.subr.mxu0 %v707
        %771 = vmatpush1.msra.mxu0 %v706
        %772 = vmatprep.subr.mxu0 %v709
        %773 = vmatpush1.msra.mxu0 %v708
        %774 = vmatprep.subr.mxu0 %v711
        %775 = vmatpush1.msra.mxu0 %v710
        %776 = vmatprep.subr.mxu0 %v713
        %777 = vmatpush1.msra.mxu0 %v712
        %778 = vmatprep.subr.mxu0 %v715
        %779 = vmatpush1.msra.mxu0 %v714
        %780 = vmatprep.subr.mxu0 %v717
        %781 = vmatpush1.msra.mxu0 %v716
        %782 = vmatprep.subr.mxu0 %v719
        %783 = vmatpush1.msra.mxu0 %v718
        %784 = vmatprep.subr.mxu0 %v721
        %785 = vmatpush1.msra.mxu0 %v720
        %786 = vmatprep.mubr.f32.mxu0 %v651
        %787 = vmatmul.mubr.f32.gmra.mrb[0].mxu0 %v650
        %v788 = vpop.f32.mrb[0].mxu0
        %v789 = vadd.f32 0.0, %v788
        %v790 = vpop.f32.mrb[0].mxu0
        %v791 = vadd.f32 0.0, %v790
        %792 = vmatprep.mubr.f32.mxu0 %v653
        %793 = vmatmul.mubr.f32.gmra.mrb[0].mxu0 %v652
        %v794 = vpop.f32.mrb[0].mxu0
        %v795 = vadd.f32 0.0, %v794
        %v796 = vpop.f32.mrb[0].mxu0
        %v797 = vadd.f32 0.0, %v796
        %798 = vdwg.mxu0
        %v799 = vadd.f32 %v654, %v789
        %v800 = vadd.f32 %v655, %v791
        %v801 = vadd.f32 %v656, %v795
        %v802 = vadd.f32 %v657, %v797
        %803 = vst [vmem:[#allocation2] sm:$0xff] %v799
        %804 = vst [vmem:[#allocation2 + $0x8] sm:$0xff] %v800
        %805 = vst [vmem:[#allocation2 + $0x10] sm:$0xff] %v801
        %806 = vst [vmem:[#allocation2 + $0x18] sm:$0xff] %v802
        %p807 = scmp.eq.s32.totalorder %s27, 1
        // Predicated region
        $region53: #{_mlp_call.1} parent=35 // pred_check
          %p808 = pneg %p807
        $region54: #{_mlp_call.1} parent=35 // pred_check_branch
          %810 = sbr.rel (%p808) target = $region56
        $region55: #{_mlp_call.1} parent=35 // pred_region
          %v811 = vld [vmem:[#allocation2] sm:$0xff]
          %v812 = vld [vmem:[#allocation2 + $0x8] sm:$0xff]
          %v813 = vld [vmem:[#allocation2 + $0x10] sm:$0xff]
          %v814 = vld [vmem:[#allocation2 + $0x18] sm:$0xff]
          %815 = vst [vmem:[#allocation9] sm:$0xff] %v811
          %816 = vst [vmem:[#allocation9 + $0x8] sm:$0xff] %v812
          %817 = vst [vmem:[#allocation9 + $0x10] sm:$0xff] %v813
          %818 = vst [vmem:[#allocation9 + $0x18] sm:$0xff] %v814
        $region56: #{_mlp_call.1} parent=35 // pred_fallthru
          _
        // Predicated region
        $region57: #{_mlp_call.1} parent=35 // pred_check
          %p819 = pneg %p156
        $region58: #{_mlp_call.1} parent=35 // pred_check_branch
          %821 = sbr.rel (%p819) target = $region60
        $region59: #{_mlp_call.1} parent=35 // pred_region
          %s822 = smul.u32 2, %s26
          %s824 = ssub.s32 512, 512
          %825 = vsyncadd [#allocation5], %s824
          %s826 = smul.addr %s822, 2
          %s827 = smul.addr %s826, 128
          %s828 = scalar_lea.hbm %s4, %s827
          %s829 = sshll.u32 [#allocation9], 4
          %s830 = int_to_ptr.vmem [resolvable:$true] %s829
          %835 = dma.vmem_to_hbm [thread:$0]  %s830, 512, %s828, [#allocation5], 256, 256, 16
        $region60: #{_mlp_call.1} parent=35 // pred_fallthru
          _
        // Predicated region
        $region61: #{_mlp_call.1} parent=35 // pred_check
          %p836 = pneg %p156
        $region62: #{_mlp_call.1} parent=35 // pred_check_branch
          %838 = sbr.rel (%p836) target = $region64
        $region63: #{_mlp_call.1} parent=35 // pred_region
          %839 = dma.done [#allocation5], 512
        $region64: #{_mlp_call.1} parent=35 // pred_fallthru
          _
      $region36: #{_mlp_call.1} parent=5 // pred_fallthru
        _
      %p840 = scmp.le.s32.totalorder 2, %s17
      // Predicated region
      $region65: #{_mlp_call.1} parent=5 // pred_check
        %p841 = pneg %p840
      $region66: #{_mlp_call.1} parent=5 // pred_check_branch
        %843 = sbr.rel (%p841) target = $region68
      $region67: #{_mlp_call.1} parent=5 // pred_region
        %s844 = ssub.s32 %s17, 2
      $region68: #{_mlp_call.1} parent=5 // pred_fallthru
        _
    $region6: #{_mlp_call.1} parent=1 // loop_footer
      %s21 = sadd.s32 1, %s17
    $region7: #{_mlp_call.1} parent=1 // loop_footer_branch
      %16 = sbr.rel target = $region3
    $region8: #{_mlp_call.1} parent=1 // loop_exit
      _
    %845 = vsyncpa [#allocation4], 1
    %s846 = scalar_lea.sflag [#allocation4], 1
    %847 = vsyncpa %s846, 1
    %848 = vsyncpa [#allocation7], 1
    %s849 = scalar_lea.sflag [#allocation7], 1
    %850 = vsyncpa %s849, 1
    %851 = vsyncpa [#allocation5], 1
    %s852 = scalar_lea.sflag [#allocation5], 1
    %853 = vsyncpa %s852, 1

</llo_original>
